<compile_context>
chip_gen: v5e
topology: v5e:2x2
jax: 0.10.0
libtpu: 0.0.40
codegen_flags: <defaults>
</compile_context>

<pallas_src>
import functools
import math

import jax
import jax.numpy as jnp
from jax.experimental import pallas as pl
from jax.experimental.pallas import tpu as pltpu


# ----------------------------------------------------------------------------
# Pallas kernel: AR_GDCNN_AMPO forward for TB batch elements at once.
# x_ref: (R, W) with R = TB*Z   out_ref: (R, 2)
# ----------------------------------------------------------------------------
def _ar_gdcnn_ampo_kernel(x_ref, Wx_ref, W12_ref, P12bd_ref, P3bd_ref, W3_ref,
                          bias_ref, out_ref, *, tb, z, k):
    f32 = jnp.float32
    bf16 = jnp.bfloat16
    r = tb * z

    def mm(a, b):
        return jnp.dot(a, b, preferred_element_type=f32)

    x = x_ref[...]                                            # (R, W) bf16

    # Fused Global_CNN | Local_CNN | AR1 | AR2 : one matmul of x against
    # [gW | 0.5*lW | ar1w | ar2w] -> (R, 2K+2); static lane slices afterwards.
    bx = bias_ref[0:1, : 2 * k + 2]                           # (1, 2K+2)
    h = mm(x, Wx_ref[...]) + bx                               # (R, 2K+2) f32
    ar = h[:, 2 * k: 2 * k + 2]                               # linear AR component, (R, 2)
    # TODO(synk): nn.Dropout created inside forward() stays in train mode in
    #             PyTorch; treated as identity (deterministic inference) here.

    # One ReLU + one tanh pass over the whole g|l slab (the local branch is
    # pre-scaled by 0.5 in the wrapper, so sigmoid(l) = 0.5*(tanh(0.5*l)+1)
    # reuses the same tanh output -> half the EUP pushes of two passes).
    t = jnp.tanh(jnp.maximum(h[:, : 2 * k], 0.0))             # (R, 2K)
    gate = t[:, :k] * (0.5 * (t[:, k: 2 * k] + 1.0))          # tanh(g)*sigmoid(l), (R, K)

    # Fused W_output1 | W_output2 -> a12 = [a1 | a2]  (R, 2K).
    b12 = bias_ref[1:2, : 2 * k]
    a12 = jnp.tanh(mm(gate.astype(bf16), W12_ref[...]) + b12)
    a1 = a12[:, :k]
    a2 = a12[:, k: 2 * k]

    # AMPO adaptive max / avg pools over the (2, K) slab per row.
    w_max = jnp.max(a12, axis=1, keepdims=True)               # (R, 1)
    w_avg = jnp.sum(a12, axis=1, keepdims=True) * (1.0 / (2.0 * k))

    # AMPO projection with block-diagonal P12/P3: the a1|a2 halves of a12
    # project in-lane, so w[:, 0:1] = proj(a1), w[:, 1:2] = proj(a2) with
    # no sublane concatenate / row split (same vmatmul push count).
    pb12 = bias_ref[2:3, : 8 * k]
    hh = jnp.tanh(mm(a12.astype(bf16), P12bd_ref[...]) + pb12)  # (R, 8K)
    w = mm(hh, P3bd_ref[...])                                 # (R, 2)

    # Single packed per-batch softmax over zones for all 4 logit columns:
    # [proj(a1), proj(a2), max, avg] share one max/exp/sum/reciprocal pass.
    logits = jnp.concatenate([w, w_max, w_avg], axis=1)       # (R, 4)
    c = logits.reshape(tb, z, 4)
    m = jnp.max(c, axis=1, keepdims=True)
    e = jnp.exp(c - m)
    s = jnp.sum(e, axis=1, keepdims=True)
    sm = (e * pl.reciprocal(s, approx=True)).reshape(r, 4)
    beta1 = sm[:, 0:1] + sm[:, 2:3]                           # softmax(proj(a1)) + softmax(max)
    beta2 = sm[:, 1:2] + sm[:, 3:4]                           # softmax(proj(a2)) + softmax(avg)
    ampo = beta1 * a1 + beta2 * a2                            # (R, K)

    b3 = bias_ref[3:4, :2]
    out_ref[...] = jnp.tanh(mm(ampo, W3_ref[...]) + b3) + ar


# ----------------------------------------------------------------------------
# Tiling plan: R = TB*Z rows per grid step, multiple of 16 (bf16 sublane
# packing), near target_rows, with >= 2 grid steps when possible so
# dimension_semantics=("parallel",) can shard across both v7x TensorCores.
# ----------------------------------------------------------------------------
def _round_up(a, m):
    return -(-a // m) * m


def _plan_tiles(batch, n_zone, target_rows, min_grid=2):
    granule = 16 // math.gcd(n_zone, 16)                      # TB granule: TB*Z % 16 == 0
    tb_target = max(granule,
                    (max(1, target_rows // n_zone) // granule) * granule)
    n_steps = max(min_grid, -(-batch // tb_target))
    tb = _round_up(-(-batch // n_steps), granule)
    grid = -(-batch // tb)
    return tb, grid * tb                                      # (TB, padded batch)


# ----------------------------------------------------------------------------
# Wrapper
# ----------------------------------------------------------------------------
def forward_pallas(x, p, *, target_rows=2048, vmem_limit_bytes=40 * 1024 * 1024):
    B, W, Z = x.shape
    K = p["W1t"].shape[0]
    f32, bf16 = jnp.float32, jnp.bfloat16

    # ---- wrapper-side parameter fusion (pure XLA glue, done once) ----
    # Local branch pre-scaled by 0.5 (ReLU commutes with positive scaling) so
    # the kernel needs a single tanh pass over the g|l slab.
    Wx = jnp.concatenate([p["gWt"], 0.5 * p["lWt"], p["ar1wt"], p["ar2wt"]], axis=1)  # (W, 2K+2)
    bx = jnp.concatenate([p["gB"], 0.5 * p["lB"], p["ar1b"], p["ar2b"]], axis=1)      # (1, 2K+2)

    W12 = jnp.concatenate([p["W1t"], p["W2t"]], axis=1)                 # (K, 2K)
    b12 = jnp.concatenate([p["b1"], p["b2"]], axis=1)                   # (1, 2K)

    # AMPO projection: P1·P2 pre-fused, then block-diagonalised so the a1|a2
    # halves of a12 project independently without any in-kernel sublane concat.
    P12 = p["P1t"] @ p["P2t"]                                           # (K, 4K)
    pb12 = p["pb1"] @ p["P2t"] + p["pb2"]                               # (1, 4K)
    zK = jnp.zeros((K, 4 * K), f32)
    P12_bd = jnp.concatenate(
        [jnp.concatenate([P12, zK], axis=1),
         jnp.concatenate([zK, P12], axis=1)], axis=0)                   # (2K, 8K)
    pb12_bd = jnp.concatenate([pb12, pb12], axis=1)                     # (1, 8K)
    z1 = jnp.zeros((4 * K, 1), f32)
    P3_bd = jnp.concatenate(
        [jnp.concatenate([p["P3t"], z1], axis=1),
         jnp.concatenate([z1, p["P3t"]], axis=1)], axis=0)              # (8K, 2)

    bp_w = 8 * K                                                        # widest bias row

    def pad_row(v):
        return jnp.pad(v, ((0, 0), (0, bp_w - v.shape[1])))

    bias_pack = jnp.concatenate(
        [pad_row(bx), pad_row(b12), pad_row(pb12_bd), pad_row(p["b3"])],
        axis=0).astype(f32)                                             # (4, 8K)

    # bf16 weights for the MXU (f32 accumulation); biases / post-matmul
    # elementwise math stay f32 (v5e has no bf16 VPU/EUP).
    params = [Wx.astype(bf16), W12.astype(bf16), P12_bd.astype(bf16),
              P3_bd.astype(f32), p["W3t"].astype(f32), bias_pack]

    # ---- input layout: (B, W, Z) -> (B*Z, W) rows, batch padded to TB ----
    TB, B_pad = _plan_tiles(B, Z, target_rows)
    xf = jnp.transpose(x, (0, 2, 1)).reshape(B * Z, W)
    if B_pad != B:
        xf = jnp.pad(xf, ((0, (B_pad - B) * Z), (0, 0)))
    xf = xf.astype(bf16)                                                # halves x DMA bytes

    R = TB * Z
    grid = (B_pad // TB,)

    kernel = functools.partial(_ar_gdcnn_ampo_kernel, tb=TB, z=Z, k=K)

    def full_spec(a):
        nd = a.ndim
        return pl.BlockSpec(a.shape, lambda i, _n=nd: (0,) * _n)

    in_specs = [pl.BlockSpec((R, W), lambda i: (i, 0))]
    in_specs += [full_spec(a) for a in params]
    out_specs = pl.BlockSpec((R, 2), lambda i: (i, 0))

    out_flat = pl.pallas_call(
        kernel,
        out_shape=jax.ShapeDtypeStruct((B_pad * Z, 2), f32),
        grid=grid,
        in_specs=in_specs,
        out_specs=out_specs,
        compiler_params=pltpu.CompilerParams(
            dimension_semantics=("parallel",),
            vmem_limit_bytes=vmem_limit_bytes),
    )(xf, *params)

    return out_flat[: B * Z].reshape(B, Z, 2)


# ----------------------------------------------------------------------------
# Pure-JAX reference (mirrors the PyTorch forward exactly, un-fused params)
# ----------------------------------------------------------------------------
def forward_ref(x, p):
    xT = jnp.transpose(x, (0, 2, 1))                           # (B, Z, W)
    g = jax.nn.relu(xT @ p["gWt"] + p["gB"])
    l = jax.nn.relu(xT @ p["lWt"] + p["lB"])
    gate = jnp.tanh(g) * jax.nn.sigmoid(l)
    a1 = jnp.tanh(gate @ p["W1t"] + p["b1"])
    a2 = jnp.tanh(gate @ p["W2t"] + p["b2"])
    z = jnp.stack([a1, a2], axis=2)                            # (B, Z, 2, K)
    w1 = jnp.max(z, axis=(2, 3), keepdims=True)                # AdaptiveMaxPool2d(1)
    w2 = jnp.mean(z, axis=(2, 3), keepdims=True)               # AdaptiveAvgPool2d(1)
    h = z @ p["P1t"] + p["pb1"]
    h = h @ p["P2t"] + p["pb2"]
    w = jnp.tanh(h) @ p["P3t"]                                 # (B, Z, 2, 1)
    w3 = jnp.concatenate([w1, w2], axis=2)                     # (B, Z, 2, 1)
    beta = jax.nn.softmax(w, axis=1) + jax.nn.softmax(w3, axis=1)
    ampo = (beta * z).sum(axis=2)                              # (B, Z, K)
    nonlinear = jnp.tanh(ampo @ p["W3t"] + p["b3"])            # (B, Z, 2)
    ar1 = xT @ p["ar1wt"] + p["ar1b"]
    ar2 = xT @ p["ar2wt"] + p["ar2b"]
    return nonlinear + jnp.concatenate([ar1, ar2], axis=2)     # (B, Z, 2)


def init_params(key, window, n_kernels):
    W, K = window, n_kernels
    ks = jax.random.split(key, 20)

    def rnd(k, shape, scale=0.1):
        return jax.random.normal(k, shape, jnp.float32) * scale

    p = {
        "gWt": rnd(ks[0], (W, K)),      "gB": rnd(ks[1], (1, K)),
        "lWt": rnd(ks[2], (W, K)),      "lB": rnd(ks[3], (1, K)),
        "W1t": rnd(ks[4], (K, K)),      "b1": rnd(ks[5], (1, K)),
        "W2t": rnd(ks[6], (K, K)),      "b2": rnd(ks[7], (1, K)),
        "W3t": rnd(ks[8], (K, 2)),      "b3": rnd(ks[9], (1, 2)),
        "P1t": rnd(ks[10], (K, 2 * K)), "pb1": rnd(ks[11], (1, 2 * K)),
        "P2t": rnd(ks[12], (2 * K, 4 * K)), "pb2": rnd(ks[13], (1, 4 * K)),
        "P3t": rnd(ks[14], (4 * K, 1)),
        "ar1wt": rnd(ks[15], (W, 1)),   "ar1b": rnd(ks[16], (1, 1)),
        "ar2wt": rnd(ks[17], (W, 1)),   "ar2b": rnd(ks[18], (1, 1)),
    }
    return p


if __name__ == "__main__":
    B, WINDOW, N_ZONE, N_KERNELS = 2, 8, 16, 32
    key = jax.random.PRNGKey(0)
    k_x, k_p = jax.random.split(key)
    params = init_params(k_p, WINDOW, N_KERNELS)

    x = jax.random.normal(k_x, (B, WINDOW, N_ZONE), jnp.float32)
    out = jax.block_until_ready(forward_pallas(x, params))
    ref = jax.block_until_ready(forward_ref(x, params))
    assert out.shape == (B, N_ZONE, 2), out.shape
    assert jnp.allclose(out, ref, rtol=1e-2, atol=1e-2), float(jnp.max(jnp.abs(out - ref)))

    # Uneven batch exercises the padded-batch / multi-step grid path.
    x3 = jax.random.normal(jax.random.PRNGKey(1), (3, WINDOW, N_ZONE), jnp.float32)
    out3 = jax.block_until_ready(forward_pallas(x3, params))
    ref3 = forward_ref(x3, params)
    assert out3.shape == (3, N_ZONE, 2), out3.shape
    assert jnp.allclose(out3, ref3, rtol=1e-2, atol=1e-2), float(jnp.max(jnp.abs(out3 - ref3)))

    print("KERNEL_OK")
</pallas_src>

<mosaic_0001>
module attributes {stable_mosaic.version = 11 : i64} {
  func.func @_ar_gdcnn_ampo_kernel(%arg0: i32, %arg1: memref<16x8xbf16, #tpu.memory_space<vmem>>, %arg2: memref<8x66xbf16, #tpu.memory_space<vmem>>, %arg3: memref<32x64xbf16, #tpu.memory_space<vmem>>, %arg4: memref<64x256xbf16, #tpu.memory_space<vmem>>, %arg5: memref<256x2xf32, #tpu.memory_space<vmem>>, %arg6: memref<32x2xf32, #tpu.memory_space<vmem>>, %arg7: memref<4x256xf32, #tpu.memory_space<vmem>>, %arg8: memref<16x2xf32, #tpu.memory_space<vmem>>) attributes {dimension_semantics = [#tpu.dimension_semantics<parallel>], iteration_bounds = array<i64: 2>, scalar_prefetch = 0 : i64, scratch_operands = 0 : i64, tpu.core_type = #tpu.core_type<tc>, window_params = [{transform_indices = @transform_0, window_bounds = array<i64: 16, 8>}, {pipeline_mode = #tpu.pipeline_mode<synchronous>, transform_indices = @transform_1, window_bounds = array<i64: 8, 66>}, {pipeline_mode = #tpu.pipeline_mode<synchronous>, transform_indices = @transform_2, window_bounds = array<i64: 32, 64>}, {pipeline_mode = #tpu.pipeline_mode<synchronous>, transform_indices = @transform_3, window_bounds = array<i64: 64, 256>}, {pipeline_mode = #tpu.pipeline_mode<synchronous>, transform_indices = @transform_4, window_bounds = array<i64: 256, 2>}, {pipeline_mode = #tpu.pipeline_mode<synchronous>, transform_indices = @transform_5, window_bounds = array<i64: 32, 2>}, {pipeline_mode = #tpu.pipeline_mode<synchronous>, transform_indices = @transform_6, window_bounds = array<i64: 4, 256>}, {transform_indices = @transform_7, window_bounds = array<i64: 16, 2>}]} {
    %c0 = arith.constant 0 : index
    %c0_0 = arith.constant 0 : index
    %0 = vector.load %arg1[%c0, %c0_0] : memref<16x8xbf16, #tpu.memory_space<vmem>>, vector<16x8xbf16>
    %c0_1 = arith.constant 0 : index
    %c0_2 = arith.constant 0 : index
    %1 = vector.load %arg7[%c0_1, %c0_2] : memref<4x256xf32, #tpu.memory_space<vmem>>, vector<1x66xf32>
    %c0_3 = arith.constant 0 : index
    %c0_4 = arith.constant 0 : index
    %2 = vector.load %arg2[%c0_3, %c0_4] : memref<8x66xbf16, #tpu.memory_space<vmem>>, vector<8x66xbf16>
    %cst = arith.constant dense<0.000000e+00> : vector<16x66xf32>
    %3 = tpu.matmul %0, %2, %cst {dimension_numbers = #tpu.dot_dimension_numbers<[1], [0], [0], [1], [0, 0, 1, 1], [], []>} : vector<16x8xbf16>, vector<8x66xbf16>, vector<16x66xf32> -> vector<16x66xf32>
    %4 = vector.broadcast %1 : vector<1x66xf32> to vector<16x66xf32>
    %5 = arith.addf %3, %4 : vector<16x66xf32>
    %6 = vector.extract_strided_slice %5 {offsets = [0, 64], sizes = [16, 2], strides = [1, 1]} : vector<16x66xf32> to vector<16x2xf32>
    %7 = vector.extract_strided_slice %5 {offsets = [0, 0], sizes = [16, 64], strides = [1, 1]} : vector<16x66xf32> to vector<16x64xf32>
    %cst_5 = arith.constant 0.000000e+00 : f32
    %8 = vector.broadcast %cst_5 : f32 to vector<16x64xf32>
    %9 = arith.maximumf %7, %8 : vector<16x64xf32>
    %10 = math.tanh %9 : vector<16x64xf32>
    %11 = vector.extract_strided_slice %10 {offsets = [0, 0], sizes = [16, 32], strides = [1, 1]} : vector<16x64xf32> to vector<16x32xf32>
    %12 = vector.extract_strided_slice %10 {offsets = [0, 32], sizes = [16, 32], strides = [1, 1]} : vector<16x64xf32> to vector<16x32xf32>
    %cst_6 = arith.constant 1.000000e+00 : f32
    %13 = vector.broadcast %cst_6 : f32 to vector<16x32xf32>
    %14 = arith.addf %12, %13 : vector<16x32xf32>
    %cst_7 = arith.constant 5.000000e-01 : f32
    %15 = vector.broadcast %cst_7 : f32 to vector<16x32xf32>
    %16 = arith.mulf %15, %14 : vector<16x32xf32>
    %17 = arith.mulf %11, %16 : vector<16x32xf32>
    %c1 = arith.constant 1 : index
    %c0_8 = arith.constant 0 : index
    %18 = vector.load %arg7[%c1, %c0_8] : memref<4x256xf32, #tpu.memory_space<vmem>>, vector<1x64xf32>
    %19 = arith.truncf %17 : vector<16x32xf32> to vector<16x32xbf16>
    %c0_9 = arith.constant 0 : index
    %c0_10 = arith.constant 0 : index
    %20 = vector.load %arg3[%c0_9, %c0_10] : memref<32x64xbf16, #tpu.memory_space<vmem>>, vector<32x64xbf16>
    %cst_11 = arith.constant dense<0.000000e+00> : vector<16x64xf32>
    %21 = tpu.matmul %19, %20, %cst_11 {dimension_numbers = #tpu.dot_dimension_numbers<[1], [0], [0], [1], [0, 0, 1, 1], [], []>} : vector<16x32xbf16>, vector<32x64xbf16>, vector<16x64xf32> -> vector<16x64xf32>
    %22 = vector.broadcast %18 : vector<1x64xf32> to vector<16x64xf32>
    %23 = arith.addf %21, %22 : vector<16x64xf32>
    %24 = math.tanh %23 : vector<16x64xf32>
    %25 = vector.extract_strided_slice %24 {offsets = [0, 0], sizes = [16, 32], strides = [1, 1]} : vector<16x64xf32> to vector<16x32xf32>
    %26 = vector.extract_strided_slice %24 {offsets = [0, 32], sizes = [16, 32], strides = [1, 1]} : vector<16x64xf32> to vector<16x32xf32>
    %cst_12 = arith.constant dense<0xFF800000> : vector<16xf32>
    %27 = vector.multi_reduction <maximumf>, %24, %cst_12 [1] : vector<16x64xf32> to vector<16xf32>
    %28 = vector.shape_cast %27 : vector<16xf32> to vector<16x1xf32>
    %cst_13 = arith.constant dense<0.000000e+00> : vector<16xf32>
    %29 = vector.multi_reduction <add>, %24, %cst_13 [1] : vector<16x64xf32> to vector<16xf32>
    %30 = vector.shape_cast %29 : vector<16xf32> to vector<16x1xf32>
    %cst_14 = arith.constant 1.562500e-02 : f32
    %31 = vector.broadcast %cst_14 : f32 to vector<16x1xf32>
    %32 = arith.mulf %30, %31 : vector<16x1xf32>
    %c2 = arith.constant 2 : index
    %c0_15 = arith.constant 0 : index
    %33 = vector.load %arg7[%c2, %c0_15] : memref<4x256xf32, #tpu.memory_space<vmem>>, vector<1x256xf32>
    %34 = arith.truncf %24 : vector<16x64xf32> to vector<16x64xbf16>
    %c0_16 = arith.constant 0 : index
    %c0_17 = arith.constant 0 : index
    %35 = vector.load %arg4[%c0_16, %c0_17] : memref<64x256xbf16, #tpu.memory_space<vmem>>, vector<64x256xbf16>
    %cst_18 = arith.constant dense<0.000000e+00> : vector<16x256xf32>
    %36 = tpu.matmul %34, %35, %cst_18 {dimension_numbers = #tpu.dot_dimension_numbers<[1], [0], [0], [1], [0, 0, 1, 1], [], []>} : vector<16x64xbf16>, vector<64x256xbf16>, vector<16x256xf32> -> vector<16x256xf32>
    %37 = vector.broadcast %33 : vector<1x256xf32> to vector<16x256xf32>
    %38 = arith.addf %36, %37 : vector<16x256xf32>
    %39 = math.tanh %38 : vector<16x256xf32>
    %c0_19 = arith.constant 0 : index
    %c0_20 = arith.constant 0 : index
    %40 = vector.load %arg5[%c0_19, %c0_20] : memref<256x2xf32, #tpu.memory_space<vmem>>, vector<256x2xf32>
    %cst_21 = arith.constant dense<0.000000e+00> : vector<16x2xf32>
    %41 = tpu.matmul %39, %40, %cst_21 {dimension_numbers = #tpu.dot_dimension_numbers<[1], [0], [0], [1], [0, 0, 1, 1], [], []>} : vector<16x256xf32>, vector<256x2xf32>, vector<16x2xf32> -> vector<16x2xf32>
    %42 = tpu.concatenate %41, %28, %32 in 1 : vector<16x2xf32>, vector<16x1xf32>, vector<16x1xf32> -> vector<16x4xf32>
    %43 = vector.shape_cast %42 : vector<16x4xf32> to vector<1x16x4xf32>
    %cst_22 = arith.constant dense<0xFF800000> : vector<1x4xf32>
    %44 = vector.multi_reduction <maximumf>, %43, %cst_22 [1] : vector<1x16x4xf32> to vector<1x4xf32>
    %45 = vector.shape_cast %44 : vector<1x4xf32> to vector<1x1x4xf32>
    %46 = vector.broadcast %45 : vector<1x1x4xf32> to vector<1x16x4xf32>
    %47 = arith.subf %43, %46 : vector<1x16x4xf32>
    %48 = math.exp %47 : vector<1x16x4xf32>
    %cst_23 = arith.constant dense<0.000000e+00> : vector<1x4xf32>
    %49 = vector.multi_reduction <add>, %48, %cst_23 [1] : vector<1x16x4xf32> to vector<1x4xf32>
    %50 = vector.shape_cast %49 : vector<1x4xf32> to vector<1x1x4xf32>
    %51 = tpu.reciprocal %50 {approx = true} : vector<1x1x4xf32> -> vector<1x1x4xf32>
    %52 = vector.broadcast %51 : vector<1x1x4xf32> to vector<1x16x4xf32>
    %53 = arith.mulf %48, %52 : vector<1x16x4xf32>
    %54 = vector.shape_cast %53 : vector<1x16x4xf32> to vector<16x4xf32>
    %55 = vector.extract_strided_slice %54 {offsets = [0, 0], sizes = [16, 1], strides = [1, 1]} : vector<16x4xf32> to vector<16x1xf32>
    %56 = vector.extract_strided_slice %54 {offsets = [0, 2], sizes = [16, 1], strides = [1, 1]} : vector<16x4xf32> to vector<16x1xf32>
    %57 = arith.addf %55, %56 : vector<16x1xf32>
    %58 = vector.extract_strided_slice %54 {offsets = [0, 1], sizes = [16, 1], strides = [1, 1]} : vector<16x4xf32> to vector<16x1xf32>
    %59 = vector.extract_strided_slice %54 {offsets = [0, 3], sizes = [16, 1], strides = [1, 1]} : vector<16x4xf32> to vector<16x1xf32>
    %60 = arith.addf %58, %59 : vector<16x1xf32>
    %61 = vector.broadcast %57 : vector<16x1xf32> to vector<16x32xf32>
    %62 = arith.mulf %61, %25 : vector<16x32xf32>
    %63 = vector.broadcast %60 : vector<16x1xf32> to vector<16x32xf32>
    %64 = arith.mulf %63, %26 : vector<16x32xf32>
    %65 = arith.addf %62, %64 : vector<16x32xf32>
    %c3 = arith.constant 3 : index
    %c0_24 = arith.constant 0 : index
    %66 = vector.load %arg7[%c3, %c0_24] : memref<4x256xf32, #tpu.memory_space<vmem>>, vector<1x2xf32>
    %c0_25 = arith.constant 0 : index
    %c0_26 = arith.constant 0 : index
    %67 = vector.load %arg6[%c0_25, %c0_26] : memref<32x2xf32, #tpu.memory_space<vmem>>, vector<32x2xf32>
    %cst_27 = arith.constant dense<0.000000e+00> : vector<16x2xf32>
    %68 = tpu.matmul %65, %67, %cst_27 {dimension_numbers = #tpu.dot_dimension_numbers<[1], [0], [0], [1], [0, 0, 1, 1], [], []>} : vector<16x32xf32>, vector<32x2xf32>, vector<16x2xf32> -> vector<16x2xf32>
    %69 = vector.broadcast %66 : vector<1x2xf32> to vector<16x2xf32>
    %70 = arith.addf %68, %69 : vector<16x2xf32>
    %71 = math.tanh %70 : vector<16x2xf32>
    %72 = arith.addf %71, %6 : vector<16x2xf32>
    %c0_28 = arith.constant 0 : index
    %c0_29 = arith.constant 0 : index
    %73 = vector.load %arg8[%c0_28, %c0_29] : memref<16x2xf32, #tpu.memory_space<vmem>>, vector<16x2xf32>
    tpu.vector_store %arg8[%c0_28, %c0_29], %72 {strides = array<i32>} : memref<16x2xf32, #tpu.memory_space<vmem>>, vector<16x2xf32>,
    return
  }
  func.func @transform_0(%arg0: i32) -> (i32, i32) {
    %c0_i32 = arith.constant 0 : i32
    %c0_i32_0 = arith.constant 0 : i32
    return %arg0, %c0_i32 : i32, i32
  }
  func.func @transform_1(%arg0: i32) -> (i32, i32) {
    %c0_i32 = arith.constant 0 : i32
    %c0_i32_0 = arith.constant 0 : i32
    %c0_i32_1 = arith.constant 0 : i32
    return %c0_i32, %c0_i32_0 : i32, i32
  }
  func.func @transform_2(%arg0: i32) -> (i32, i32) {
    %c0_i32 = arith.constant 0 : i32
    %c0_i32_0 = arith.constant 0 : i32
    %c0_i32_1 = arith.constant 0 : i32
    return %c0_i32, %c0_i32_0 : i32, i32
  }
  func.func @transform_3(%arg0: i32) -> (i32, i32) {
    %c0_i32 = arith.constant 0 : i32
    %c0_i32_0 = arith.constant 0 : i32
    %c0_i32_1 = arith.constant 0 : i32
    return %c0_i32, %c0_i32_0 : i32, i32
  }
  func.func @transform_4(%arg0: i32) -> (i32, i32) {
    %c0_i32 = arith.constant 0 : i32
    %c0_i32_0 = arith.constant 0 : i32
    %c0_i32_1 = arith.constant 0 : i32
    return %c0_i32, %c0_i32_0 : i32, i32
  }
  func.func @transform_5(%arg0: i32) -> (i32, i32) {
    %c0_i32 = arith.constant 0 : i32
    %c0_i32_0 = arith.constant 0 : i32
    %c0_i32_1 = arith.constant 0 : i32
    return %c0_i32, %c0_i32_0 : i32, i32
  }
  func.func @transform_6(%arg0: i32) -> (i32, i32) {
    %c0_i32 = arith.constant 0 : i32
    %c0_i32_0 = arith.constant 0 : i32
    %c0_i32_1 = arith.constant 0 : i32
    return %c0_i32, %c0_i32_0 : i32, i32
  }
  func.func @transform_7(%arg0: i32) -> (i32, i32) {
    %c0_i32 = arith.constant 0 : i32
    %c0_i32_0 = arith.constant 0 : i32
    return %arg0, %c0_i32 : i32, i32
  }
}

</mosaic_0001>

<llo_original>
// kernel: tpu_custom_call.1
$region0: #{tpu_custom_call.1}
  #allocation0 [shape = 'u32[]', space=smem, size = 0x4, offset = 0x4, fixed_abs, tag = 'smem constant byte address 0x4 - core index']
  #allocation1 [shape = 'u32[72,128]{1,0:T(1,128)}', space=vmem, size = 0x9000, scoped, tag = 'internal scratch']
  %s0 = inlined_call_operand.vmem [shape: bf16[32,8], index: 0, kind: input, shape index: {}]
  %s1 = inlined_call_operand.vmem [shape: bf16[8,66], index: 1, kind: input, shape index: {}]
  %s2 = inlined_call_operand.vmem [shape: bf16[32,64], index: 2, kind: input, shape index: {}]
  %s3 = inlined_call_operand.vmem [shape: bf16[64,256], index: 3, kind: input, shape index: {}]
  %s4 = inlined_call_operand.vmem [shape: f32[256,2], index: 4, kind: input, shape index: {}]
  %s5 = inlined_call_operand.vmem [shape: f32[32,2], index: 5, kind: input, shape index: {}]
  %s6 = inlined_call_operand.vmem [shape: f32[4,256], index: 6, kind: input, shape index: {}]
  %s7 = inlined_call_operand.vmem [shape: f32[32,2], index: 7, kind: output, shape index: {}]
  %s8 = sld [smem:[#allocation0]]
  $region61: #{tpu_custom_call.1} parent=0
    _
  %s10 = ssub.s32 1, %s8
  %s11 = scalar_select 0, %s10, %s8
  loop: start=0, step=1, limit=4
  $region2: #{tpu_custom_call.1} parent=0 // loop_pre_header
    _
  $region3: #{tpu_custom_call.1} parent=0 // loop_header
    %s13 = sphi 0, %s17
    %p14 = scmp.ge.s32.totalorder %s13, 4
    %s23 = sphi 0, %s25
    %s26 = sphi 0, %s23
    %s27 = sphi 0, %s26
    %s43 = sphi 0, %s27
    %s47 = sphi 0, %s47
    %s49 = sphi 0, %s47
    %s50 = sphi 0, %s49
    %s64 = sphi 0, %s50
    %s68 = sphi 0, %s68
    %s70 = sphi 0, %s68
    %s71 = sphi 0, %s70
    %s85 = sphi 0, %s71
    %s89 = sphi 0, %s89
    %s91 = sphi 0, %s89
    %s92 = sphi 0, %s91
    %s106 = sphi 0, %s92
    %s110 = sphi 0, %s110
    %s112 = sphi 0, %s110
    %s113 = sphi 0, %s112
    %s127 = sphi 0, %s113
    %s131 = sphi 0, %s131
    %s133 = sphi 0, %s131
    %s134 = sphi 0, %s133
    %s148 = sphi 0, %s134
    %s152 = sphi 0, %s152
    %s154 = sphi 0, %s152
    %s155 = sphi 0, %s154
    %s169 = sphi 0, %s155
    %s175 = sphi 0, %s177
    %s178 = sphi 0, %s175
    %s179 = sphi 0, %s178
    %s195 = sphi 0, %s179
  $region4: #{tpu_custom_call.1} parent=0 // loop_header_branch
    %16 = sbr.rel (%p14) target = $region8
  $region5: #{tpu_custom_call.1} parent=0 // loop_body
    %s18 = ssub.s32 %s13, 1
    %s19 = ssub.s32 %s13, 2
    %s20 = sadd.s32 %s13, 1
    %s21 = ssub.s32 %s13, %s20
    %p22 = scmp.eq.s32.totalorder %s21, 0
    %s24 = sadd.s32 %s23, 1
    %s25 = scalar_select %p22, %s23, %s24
    %p28 = pneg %p22
    %p29 = scmp.eq.s32.totalorder %s13, 1
    %p30 = por %p28, %p29
    %p31 = scmp.ne.s32.totalorder %s23, %s26
    %p32 = scmp.eq.s32.totalorder %s13, 0
    %p33 = por %p31, %p32
    %p34 = scmp.ne.s32.totalorder %s23, %s26
    %p35 = scmp.eq.s32.totalorder %s18, 1
    %p36 = por %p34, %p35
    %p37 = scmp.ne.s32.totalorder %s26, %s27
    %p38 = scmp.eq.s32.totalorder %s18, 0
    %p39 = por %p37, %p38
    %p40 = scmp.ne.s32.totalorder %s26, %s27
    %p41 = scmp.eq.s32.totalorder %s19, 1
    %p42 = por %p40, %p41
    %p44 = scmp.ne.s32.totalorder %s27, %s43
    %p45 = scmp.eq.s32.totalorder %s19, 0
    %p46 = por %p44, %p45
    %s48 = sadd.s32 %s47, 1
    %p51 = scmp.eq.s32.totalorder %s13, 1
    %p52 = scmp.ne.s32.totalorder %s47, %s49
    %p53 = scmp.eq.s32.totalorder %s13, 0
    %p54 = por %p52, %p53
    %p55 = scmp.ne.s32.totalorder %s47, %s49
    %p56 = scmp.eq.s32.totalorder %s18, 1
    %p57 = por %p55, %p56
    %p58 = scmp.ne.s32.totalorder %s49, %s50
    %p59 = scmp.eq.s32.totalorder %s18, 0
    %p60 = por %p58, %p59
    %p61 = scmp.ne.s32.totalorder %s49, %s50
    %p62 = scmp.eq.s32.totalorder %s19, 1
    %p63 = por %p61, %p62
    %p65 = scmp.ne.s32.totalorder %s50, %s64
    %p66 = scmp.eq.s32.totalorder %s19, 0
    %p67 = por %p65, %p66
    %s69 = sadd.s32 %s68, 1
    %p72 = scmp.eq.s32.totalorder %s13, 1
    %p73 = scmp.ne.s32.totalorder %s68, %s70
    %p74 = scmp.eq.s32.totalorder %s13, 0
    %p75 = por %p73, %p74
    %p76 = scmp.ne.s32.totalorder %s68, %s70
    %p77 = scmp.eq.s32.totalorder %s18, 1
    %p78 = por %p76, %p77
    %p79 = scmp.ne.s32.totalorder %s70, %s71
    %p80 = scmp.eq.s32.totalorder %s18, 0
    %p81 = por %p79, %p80
    %p82 = scmp.ne.s32.totalorder %s70, %s71
    %p83 = scmp.eq.s32.totalorder %s19, 1
    %p84 = por %p82, %p83
    %p86 = scmp.ne.s32.totalorder %s71, %s85
    %p87 = scmp.eq.s32.totalorder %s19, 0
    %p88 = por %p86, %p87
    %s90 = sadd.s32 %s89, 1
    %p93 = scmp.eq.s32.totalorder %s13, 1
    %p94 = scmp.ne.s32.totalorder %s89, %s91
    %p95 = scmp.eq.s32.totalorder %s13, 0
    %p96 = por %p94, %p95
    %p97 = scmp.ne.s32.totalorder %s89, %s91
    %p98 = scmp.eq.s32.totalorder %s18, 1
    %p99 = por %p97, %p98
    %p100 = scmp.ne.s32.totalorder %s91, %s92
    %p101 = scmp.eq.s32.totalorder %s18, 0
    %p102 = por %p100, %p101
    %p103 = scmp.ne.s32.totalorder %s91, %s92
    %p104 = scmp.eq.s32.totalorder %s19, 1
    %p105 = por %p103, %p104
    %p107 = scmp.ne.s32.totalorder %s92, %s106
    %p108 = scmp.eq.s32.totalorder %s19, 0
    %p109 = por %p107, %p108
    %s111 = sadd.s32 %s110, 1
    %p114 = scmp.eq.s32.totalorder %s13, 1
    %p115 = scmp.ne.s32.totalorder %s110, %s112
    %p116 = scmp.eq.s32.totalorder %s13, 0
    %p117 = por %p115, %p116
    %p118 = scmp.ne.s32.totalorder %s110, %s112
    %p119 = scmp.eq.s32.totalorder %s18, 1
    %p120 = por %p118, %p119
    %p121 = scmp.ne.s32.totalorder %s112, %s113
    %p122 = scmp.eq.s32.totalorder %s18, 0
    %p123 = por %p121, %p122
    %p124 = scmp.ne.s32.totalorder %s112, %s113
    %p125 = scmp.eq.s32.totalorder %s19, 1
    %p126 = por %p124, %p125
    %p128 = scmp.ne.s32.totalorder %s113, %s127
    %p129 = scmp.eq.s32.totalorder %s19, 0
    %p130 = por %p128, %p129
    %s132 = sadd.s32 %s131, 1
    %p135 = scmp.eq.s32.totalorder %s13, 1
    %p136 = scmp.ne.s32.totalorder %s131, %s133
    %p137 = scmp.eq.s32.totalorder %s13, 0
    %p138 = por %p136, %p137
    %p139 = scmp.ne.s32.totalorder %s131, %s133
    %p140 = scmp.eq.s32.totalorder %s18, 1
    %p141 = por %p139, %p140
    %p142 = scmp.ne.s32.totalorder %s133, %s134
    %p143 = scmp.eq.s32.totalorder %s18, 0
    %p144 = por %p142, %p143
    %p145 = scmp.ne.s32.totalorder %s133, %s134
    %p146 = scmp.eq.s32.totalorder %s19, 1
    %p147 = por %p145, %p146
    %p149 = scmp.ne.s32.totalorder %s134, %s148
    %p150 = scmp.eq.s32.totalorder %s19, 0
    %p151 = por %p149, %p150
    %s153 = sadd.s32 %s152, 1
    %p156 = scmp.eq.s32.totalorder %s13, 1
    %p157 = scmp.ne.s32.totalorder %s152, %s154
    %p158 = scmp.eq.s32.totalorder %s13, 0
    %p159 = por %p157, %p158
    %p160 = scmp.ne.s32.totalorder %s152, %s154
    %p161 = scmp.eq.s32.totalorder %s18, 1
    %p162 = por %p160, %p161
    %p163 = scmp.ne.s32.totalorder %s154, %s155
    %p164 = scmp.eq.s32.totalorder %s18, 0
    %p165 = por %p163, %p164
    %p166 = scmp.ne.s32.totalorder %s154, %s155
    %p167 = scmp.eq.s32.totalorder %s19, 1
    %p168 = por %p166, %p167
    %p170 = scmp.ne.s32.totalorder %s155, %s169
    %p171 = scmp.eq.s32.totalorder %s19, 0
    %p172 = por %p170, %p171
    %s173 = ssub.s32 %s13, %s20
    %p174 = scmp.eq.s32.totalorder %s173, 0
    %s176 = sadd.s32 %s175, 1
    %s177 = scalar_select %p174, %s175, %s176
    %p180 = pneg %p174
    %p181 = scmp.eq.s32.totalorder %s13, 1
    %p182 = por %p180, %p181
    %p183 = scmp.ne.s32.totalorder %s175, %s178
    %p184 = scmp.eq.s32.totalorder %s13, 0
    %p185 = por %p183, %p184
    %p186 = scmp.ne.s32.totalorder %s175, %s178
    %p187 = scmp.eq.s32.totalorder %s18, 1
    %p188 = por %p186, %p187
    %p189 = scmp.ne.s32.totalorder %s178, %s179
    %p190 = scmp.eq.s32.totalorder %s18, 0
    %p191 = por %p189, %p190
    %p192 = scmp.ne.s32.totalorder %s178, %s179
    %p193 = scmp.eq.s32.totalorder %s19, 1
    %p194 = por %p192, %p193
    %p196 = scmp.ne.s32.totalorder %s179, %s195
    %p197 = scmp.eq.s32.totalorder %s19, 0
    %p198 = por %p196, %p197
    %p199 = scmp.le.s32.totalorder 1, %s13
    %p200 = scmp.lt.s32.totalorder %s13, 3
    %p201 = pnand %p199, %p200
    %p202 = pneg %p201
    // Predicated region
    $region9: #{tpu_custom_call.1} parent=5 // pred_check
      _
    $region10: #{tpu_custom_call.1} parent=5 // pred_check_branch
      %204 = sbr.rel (%p201) target = $region12
    $region11: #{tpu_custom_call.1} parent=5 // pred_region
      %s205 = ssub.s32 %s13, 1
      // Predicated region
      $region13: #{tpu_custom_call.1} parent=11 // pred_check
        %p206 = pneg %p60
      $region14: #{tpu_custom_call.1} parent=11 // pred_check_branch
        %208 = sbr.rel (%p206) target = $region16
      $region15: #{tpu_custom_call.1} parent=11 // pred_region
        _
      $region16: #{tpu_custom_call.1} parent=11 // pred_fallthru
        _
      // Predicated region
      $region17: #{tpu_custom_call.1} parent=11 // pred_check
        %p209 = pneg %p81
      $region18: #{tpu_custom_call.1} parent=11 // pred_check_branch
        %211 = sbr.rel (%p209) target = $region20
      $region19: #{tpu_custom_call.1} parent=11 // pred_region
        _
      $region20: #{tpu_custom_call.1} parent=11 // pred_fallthru
        _
      // Predicated region
      $region21: #{tpu_custom_call.1} parent=11 // pred_check
        %p212 = pneg %p102
      $region22: #{tpu_custom_call.1} parent=11 // pred_check_branch
        %214 = sbr.rel (%p212) target = $region24
      $region23: #{tpu_custom_call.1} parent=11 // pred_region
        _
      $region24: #{tpu_custom_call.1} parent=11 // pred_fallthru
        _
      // Predicated region
      $region25: #{tpu_custom_call.1} parent=11 // pred_check
        %p215 = pneg %p123
      $region26: #{tpu_custom_call.1} parent=11 // pred_check_branch
        %217 = sbr.rel (%p215) target = $region28
      $region27: #{tpu_custom_call.1} parent=11 // pred_region
        _
      $region28: #{tpu_custom_call.1} parent=11 // pred_fallthru
        _
      // Predicated region
      $region29: #{tpu_custom_call.1} parent=11 // pred_check
        %p218 = pneg %p144
      $region30: #{tpu_custom_call.1} parent=11 // pred_check_branch
        %220 = sbr.rel (%p218) target = $region32
      $region31: #{tpu_custom_call.1} parent=11 // pred_region
        _
      $region32: #{tpu_custom_call.1} parent=11 // pred_fallthru
        _
      // Predicated region
      $region33: #{tpu_custom_call.1} parent=11 // pred_check
        %p221 = pneg %p165
      $region34: #{tpu_custom_call.1} parent=11 // pred_check_branch
        %223 = sbr.rel (%p221) target = $region36
      $region35: #{tpu_custom_call.1} parent=11 // pred_region
        _
      $region36: #{tpu_custom_call.1} parent=11 // pred_fallthru
        _
    $region12: #{tpu_custom_call.1} parent=5 // pred_fallthru
      _
    %p224 = scmp.lt.s32.totalorder %s13, 2
    // Predicated region
    $region37: #{tpu_custom_call.1} parent=5 // pred_check
      %p225 = pneg %p224
    $region38: #{tpu_custom_call.1} parent=5 // pred_check_branch
      %227 = sbr.rel (%p225) target = $region40
    $region39: #{tpu_custom_call.1} parent=5 // pred_region
      // Predicated region
      $region41: #{tpu_custom_call.1} parent=39 // pred_check
        %p228 = pneg %p33
      $region42: #{tpu_custom_call.1} parent=39 // pred_check_branch
        %230 = sbr.rel (%p228) target = $region44
      $region43: #{tpu_custom_call.1} parent=39 // pred_region
        %s231 = smul.u32 2, %s13
        %p232 = scmp.lt.s32.totalorder %s231, 3
        %s233 = scalar_select %p232, %s231, 3
        %s234 = smul.addr %s233, 4
        %s235 = scalar_lea.vmem %s0, %s234
        %s236 = smul.u32 2, %s13
      $region44: #{tpu_custom_call.1} parent=39 // pred_fallthru
        _
    $region40: #{tpu_custom_call.1} parent=5 // pred_fallthru
      _
    %p237 = scmp.le.s32.totalorder 1, %s13
    %p238 = scmp.lt.s32.totalorder %s13, 3
    %p239 = pnand %p237, %p238
    %p240 = pneg %p239
    // Predicated region
    $region45: #{tpu_custom_call.1} parent=5 // pred_check
      _
    $region46: #{tpu_custom_call.1} parent=5 // pred_check_branch
      %242 = sbr.rel (%p239) target = $region48
    $region47: #{tpu_custom_call.1} parent=5 // pred_region
      %s243 = ssub.s32 %s13, 1
      %s244 = smul.u32 2, %s18
      %p245 = scmp.lt.s32.totalorder %s244, 3
      %s246 = scalar_select %p245, %s244, 3
      %s247 = smul.addr %s246, 4
      %s248 = scalar_lea.vmem %s0, %s247
      %p249 = pneg %p39
      %p250 = pneg %p36
      %p251 = pneg %p60
      %p252 = pneg %p57
      %p253 = pneg %p81
      %p254 = pneg %p78
      %p255 = pneg %p102
      %p256 = pneg %p99
      %p257 = pneg %p123
      %p258 = pneg %p120
      %p259 = pneg %p144
      %p260 = pneg %p141
      %p261 = pneg %p165
      %p262 = pneg %p162
      %p263 = pneg %p191
      %p264 = pneg %p188
      %s265 = smul.u32 2, %s18
      %p266 = scmp.lt.s32.totalorder %s265, 3
      %s267 = scalar_select %p266, %s265, 3
      %s268 = smul.addr %s267, 8
      %s269 = scalar_lea.vmem %s7, %s268
      %s270 = smul.u32 2, %s18
      %p271 = scmp.lt.s32.totalorder %s270, 3
      %s272 = scalar_select %p271, %s270, 3
      %s273 = smul.addr %s272, 4
      %s274 = scalar_lea.vmem %s0, %s273
      %s275 = smul.u32 2, %s18
      %s276 = smul.u32 2, %s18
      %p277 = scmp.lt.s32.totalorder %s276, 3
      %s278 = scalar_select %p277, %s276, 3
      %s279 = smul.addr %s278, 8
      %s280 = scalar_lea.vmem %s7, %s279
      %s281 = smul.u32 2, %s18
      %v283 = vld [vmem:[%s274] sm:$0xf]
      %v284 = vld [vmem:[%s274 + $0x4] sm:$0xf]
      %v285 = vld [vmem:[%s6] sm:$0x1]
      %v286 = vld [vmem:[%s1] sm:$0xf]
      %v287 = vperm.slane %v285, 0
      %v290 = vunpack.c.l.b16 %v283
      %v291 = vunpack.c.l.b16 %v284
      %v292 = vpack.c.b16 %v291, %v290
      %vm293 = vcmask 64512
      %v295 = vsel %vm293, %v292, 0
      %vm297 = vcmask 1043456
      %v299 = vsel %vm297, %v286, 0
      %301 = vmatpush.bf16.msra.mxu0 0
      %302 = vmatpush.bf16.msra.mxu0 0
      %303 = vmatpush.bf16.msra.mxu0 0
      %304 = vmatpush.bf16.msra.mxu0 0
      %305 = vmatpush.bf16.msra.mxu0 0
      %306 = vmatpush.bf16.msra.mxu0 0
      %307 = vmatpush.bf16.msra.mxu0 0
      %308 = vmatpush.bf16.msra.mxu0 %v299
      %309 = vmatmul.bf16.gmra.mxu0 %v295
      %v310 = vpop.f32.mrf.mxu0
      %v311 = vadd.f32 %v287, %v310
      %v312 = vpop.f32.mrf.mxu0
      %v313 = vadd.f32 %v287, %v312
      %314 = vdwg.mxu0
      %v315 = vmax.f32 %v311, 0.0
      %v316 = vmax.f32 %v313, 0.0
      %v317 = vtanh.pop %v315
      %v318 = vtanh.pop %v316
      %v319 = vadd.f32 %v317, 1.0
      %v320 = vadd.f32 %v318, 1.0
      %v321 = vmul.f32 %v319, 0.5
      %v322 = vmul.f32 %v320, 0.5
      %325 = vrot.lane.b32.xlu0 %v321, 96
      %v326 = vpop.permute.xlu0 %325
      %327 = vrot.lane.b32.xlu0 %v322, 96
      %v328 = vpop.permute.xlu0 %327
      %v331 = vmul.f32 %v317, %v326
      %v332 = vmul.f32 %v318, %v328
      %v333 = vld [vmem:[%s6 + $0x1] sm:$0x1]
      %v334 = vpack.c.bf16 %v332, %v331
      %v335 = vld [vmem:[%s2] sm:$0xf]
      %v336 = vld [vmem:[%s2 + $0x4] sm:$0xf]
      %v337 = vld [vmem:[%s2 + $0x8] sm:$0xf]
      %v338 = vld [vmem:[%s2 + $0xc] sm:$0xf]
      %v339 = vperm.slane %v333, 0
      %v344 = vunpack.c.l.b16 %v335
      %v345 = vunpack.c.l.b16 %v336
      %v346 = vunpack.c.l.b16 %v337
      %v347 = vunpack.c.l.b16 %v338
      %v348 = vpack.c.b16 %v345, %v344
      %v349 = vpack.c.b16 %v347, %v346
      %vm352 = vcmask 261120
      %v354 = vsel %vm352, %v334, 0
      %356 = vmatpush.bf16.msra.mxu0 0
      %357 = vmatpush.bf16.msra.mxu0 0
      %358 = vmatpush.bf16.msra.mxu0 0
      %359 = vmatpush.bf16.msra.mxu0 0
      %360 = vmatpush.bf16.msra.mxu0 0
      %361 = vmatpush.bf16.msra.mxu0 0
      %362 = vmatpush.bf16.msra.mxu0 %v349
      %363 = vmatpush.bf16.msra.mxu0 %v348
      %364 = vmatmul.bf16.gmra.mxu0 %v354
      %v365 = vpop.f32.mrf.mxu0
      %v366 = vadd.f32 %v339, %v365
      %v367 = vpop.f32.mrf.mxu0
      %v368 = vadd.f32 %v339, %v367
      %369 = vdwg.mxu0
      %v370 = vtanh.pop %v366
      %v371 = vtanh.pop %v368
      %vm372 = vcmask 523264
      %v373 = vsel %vm372, %v370, -inf
      %374 = vmax.xlane.f32.xlu0 %v373
      %v375 = vpop.xlane.xlu0 %374
      %v376 = vsel %vm372, %v371, -inf
      %377 = vmax.xlane.f32.xlu0 %v376
      %v378 = vpop.xlane.xlu0 %377
      %v379 = vsel %vm372, %v370, 0.0
      %380 = vadd.xlane.f32.xlu0 %v379
      %v381 = vpop.xlane.xlu0 %380
      %v382 = vsel %vm372, %v371, 0.0
      %383 = vadd.xlane.f32.xlu0 %v382
      %v384 = vpop.xlane.xlu0 %383
      %v385 = vmul.f32 %v381, 0.015625
      %v386 = vmul.f32 %v384, 0.015625
      %s387 = scalar_lea.vmem %s6, 2
      %v388 = vld [vmem:[%s387] ss:$4 sm:$0x3]
      %v389 = vpack.c.bf16 %v371, %v370
      %v390 = vld [vmem:[%s3] sm:$0xff]
      %v391 = vld [vmem:[%s3 + $0x8] sm:$0xff]
      %v392 = vld [vmem:[%s3 + $0x10] sm:$0xff]
      %v393 = vld [vmem:[%s3 + $0x18] sm:$0xff]
      %v394 = vld [vmem:[%s3 + $0x20] sm:$0xff]
      %v395 = vld [vmem:[%s3 + $0x28] sm:$0xff]
      %v396 = vld [vmem:[%s3 + $0x30] sm:$0xff]
      %v397 = vld [vmem:[%s3 + $0x38] sm:$0xff]
      %v399 = vperm.slane %v388, 0
      %v400 = vperm.slane %v388, 1
      %v411 = vunpack.c.l.b16 %v390
      %v412 = vunpack.c.h.b16 %v390
      %v413 = vunpack.c.l.b16 %v391
      %v414 = vunpack.c.h.b16 %v391
      %v415 = vunpack.c.l.b16 %v392
      %v416 = vunpack.c.h.b16 %v392
      %v417 = vunpack.c.l.b16 %v393
      %v418 = vunpack.c.h.b16 %v393
      %v419 = vunpack.c.l.b16 %v394
      %v420 = vunpack.c.h.b16 %v394
      %v421 = vunpack.c.l.b16 %v395
      %v422 = vunpack.c.h.b16 %v395
      %v423 = vunpack.c.l.b16 %v396
      %v424 = vunpack.c.h.b16 %v396
      %v425 = vunpack.c.l.b16 %v397
      %v426 = vunpack.c.h.b16 %v397
      %v427 = vpack.c.b16 %v413, %v411
      %v428 = vpack.c.b16 %v414, %v412
      %v429 = vpack.c.b16 %v417, %v415
      %v430 = vpack.c.b16 %v418, %v416
      %v431 = vpack.c.b16 %v421, %v419
      %v432 = vpack.c.b16 %v422, %v420
      %v433 = vpack.c.b16 %v425, %v423
      %v434 = vpack.c.b16 %v426, %v424
      %v444 = vsel %vm372, %v389, 0
      %446 = vmatpush.bf16.msra.mxu0 0
      %447 = vmatpush.bf16.msra.mxu0 0
      %448 = vmatpush.bf16.msra.mxu0 0
      %449 = vmatpush.bf16.msra.mxu0 0
      %450 = vmatpush.bf16.msra.mxu0 %v433
      %451 = vmatpush.bf16.msra.mxu0 %v431
      %452 = vmatpush.bf16.msra.mxu0 %v429
      %453 = vmatpush.bf16.msra.mxu0 %v427
      %454 = vmatmul.bf16.gmra.mxu0 %v444
      %v455 = vpop.f32.mrf.mxu0
      %v456 = vadd.f32 %v399, %v455
      %v457 = vpop.f32.mrf.mxu0
      %v458 = vadd.f32 %v399, %v457
      %459 = vdwg.mxu0
      %460 = vmatpush.bf16.msra.mxu0 0
      %461 = vmatpush.bf16.msra.mxu0 0
      %462 = vmatpush.bf16.msra.mxu0 0
      %463 = vmatpush.bf16.msra.mxu0 0
      %464 = vmatpush.bf16.msra.mxu0 %v434
      %465 = vmatpush.bf16.msra.mxu0 %v432
      %466 = vmatpush.bf16.msra.mxu0 %v430
      %467 = vmatpush.bf16.msra.mxu0 %v428
      %468 = vmatmul.bf16.gmra.mxu0 %v444
      %v469 = vpop.f32.mrf.mxu0
      %v470 = vadd.f32 %v400, %v469
      %v471 = vpop.f32.mrf.mxu0
      %v472 = vadd.f32 %v400, %v471
      %473 = vdwg.mxu0
      %v474 = vtanh.pop %v456
      %v475 = vtanh.pop %v470
      %v476 = vtanh.pop %v458
      %v477 = vtanh.pop %v472
      %v478 = vld [vmem:[%s4] sm:$0xff]
      %v479 = vld [vmem:[%s4 + $0x8] sm:$0xff]
      %v480 = vld [vmem:[%s4 + $0x10] sm:$0xff]
      %v481 = vld [vmem:[%s4 + $0x18] sm:$0xff]
      %v482 = vld [vmem:[%s4 + $0x20] sm:$0xff]
      %v483 = vld [vmem:[%s4 + $0x28] sm:$0xff]
      %v484 = vld [vmem:[%s4 + $0x30] sm:$0xff]
      %v485 = vld [vmem:[%s4 + $0x38] sm:$0xff]
      %v486 = vld [vmem:[%s4 + $0x40] sm:$0xff]
      %v487 = vld [vmem:[%s4 + $0x48] sm:$0xff]
      %v488 = vld [vmem:[%s4 + $0x50] sm:$0xff]
      %v489 = vld [vmem:[%s4 + $0x58] sm:$0xff]
      %v490 = vld [vmem:[%s4 + $0x60] sm:$0xff]
      %v491 = vld [vmem:[%s4 + $0x68] sm:$0xff]
      %v492 = vld [vmem:[%s4 + $0x70] sm:$0xff]
      %v493 = vld [vmem:[%s4 + $0x78] sm:$0xff]
      %v494 = vld [vmem:[%s4 + $0x80] sm:$0xff]
      %v495 = vld [vmem:[%s4 + $0x88] sm:$0xff]
      %v496 = vld [vmem:[%s4 + $0x90] sm:$0xff]
      %v497 = vld [vmem:[%s4 + $0x98] sm:$0xff]
      %v498 = vld [vmem:[%s4 + $0xa0] sm:$0xff]
      %v499 = vld [vmem:[%s4 + $0xa8] sm:$0xff]
      %v500 = vld [vmem:[%s4 + $0xb0] sm:$0xff]
      %v501 = vld [vmem:[%s4 + $0xb8] sm:$0xff]
      %v502 = vld [vmem:[%s4 + $0xc0] sm:$0xff]
      %v503 = vld [vmem:[%s4 + $0xc8] sm:$0xff]
      %v504 = vld [vmem:[%s4 + $0xd0] sm:$0xff]
      %v505 = vld [vmem:[%s4 + $0xd8] sm:$0xff]
      %v506 = vld [vmem:[%s4 + $0xe0] sm:$0xff]
      %v507 = vld [vmem:[%s4 + $0xe8] sm:$0xff]
      %v508 = vld [vmem:[%s4 + $0xf0] sm:$0xff]
      %v509 = vld [vmem:[%s4 + $0xf8] sm:$0xff]
      %510 = vmatpush.msra.mxu0 %v493
      %511 = vmatpush.msra.mxu0 %v492
      %512 = vmatpush.msra.mxu0 %v491
      %513 = vmatpush.msra.mxu0 %v490
      %514 = vmatpush.msra.mxu0 %v489
      %515 = vmatpush.msra.mxu0 %v488
      %516 = vmatpush.msra.mxu0 %v487
      %517 = vmatpush.msra.mxu0 %v486
      %518 = vmatpush.msra.mxu0 %v485
      %519 = vmatpush.msra.mxu0 %v484
      %520 = vmatpush.msra.mxu0 %v483
      %521 = vmatpush.msra.mxu0 %v482
      %522 = vmatpush.msra.mxu0 %v481
      %523 = vmatpush.msra.mxu0 %v480
      %524 = vmatpush.msra.mxu0 %v479
      %525 = vmatpush.msra.mxu0 %v478
      %526 = vmatmul.f32.gmra.mxu0 %v474
      %v527 = vpop.f32.mrf.mxu0
      %v528 = vadd.f32 0.0, %v527
      %529 = vmatmul.f32.gmra.mxu0 %v476
      %v530 = vpop.f32.mrf.mxu0
      %v531 = vadd.f32 0.0, %v530
      %532 = vdwg.mxu0
      %533 = vmatpush.msra.mxu0 %v509
      %534 = vmatpush.msra.mxu0 %v508
      %535 = vmatpush.msra.mxu0 %v507
      %536 = vmatpush.msra.mxu0 %v506
      %537 = vmatpush.msra.mxu0 %v505
      %538 = vmatpush.msra.mxu0 %v504
      %539 = vmatpush.msra.mxu0 %v503
      %540 = vmatpush.msra.mxu0 %v502
      %541 = vmatpush.msra.mxu0 %v501
      %542 = vmatpush.msra.mxu0 %v500
      %543 = vmatpush.msra.mxu0 %v499
      %544 = vmatpush.msra.mxu0 %v498
      %545 = vmatpush.msra.mxu0 %v497
      %546 = vmatpush.msra.mxu0 %v496
      %547 = vmatpush.msra.mxu0 %v495
      %548 = vmatpush.msra.mxu0 %v494
      %549 = vmatmul.f32.gmra.mxu0 %v475
      %v550 = vpop.f32.mrf.mxu0
      %v551 = vadd.f32 %v528, %v550
      %552 = vmatmul.f32.gmra.mxu0 %v477
      %v553 = vpop.f32.mrf.mxu0
      %v554 = vadd.f32 %v531, %v553
      %555 = vdwg.mxu0
      %vm556 = vcmask 15360
      %v557 = vsel %vm556, %v551, %v375
      %v558 = vsel %vm556, %v554, %v378
      %vm559 = vcmask 23552
      %v560 = vsel %vm559, %v557, %v385
      %v561 = vsel %vm559, %v558, %v386
      %vm562 = vcmask 31744
      %v563 = vsel %vm562, %v560, -inf
      %v564 = vsel %vm562, %v561, -inf
      %v565 = vmax.f32 %v563, %v564
      %v566 = vrot.slane %v565, 4
      %v567 = vmax.f32 %v565, %v566
      %v568 = vrot.slane %v567, 2
      %v569 = vmax.f32 %v567, %v568
      %v570 = vrot.slane %v569, 1
      %v571 = vmax.f32 %v569, %v570
      %v572 = vsub.f32 %v560, %v571
      %v573 = vsub.f32 %v561, %v571
      %v574 = vmul.f32 %v572, 1.442695
      %v575 = vpow.pop %v574
      %v576 = vmul.f32 %v573, 1.442695
      %v577 = vpow.pop %v576
      %v578 = vsel %vm562, %v575, 0.0
      %v579 = vsel %vm562, %v577, 0.0
      %v580 = vadd.f32 %v578, %v579
      %v581 = vrot.slane %v580, 4
      %v582 = vadd.f32 %v580, %v581
      %v583 = vrot.slane %v582, 2
      %v584 = vadd.f32 %v582, %v583
      %v585 = vrot.slane %v584, 1
      %v586 = vadd.f32 %v584, %v585
      %v587 = vrcp.pop %v586
      %v588 = vmul.f32 %v575, %v587
      %v589 = vmul.f32 %v577, %v587
      %592 = vrot.lane.b32.xlu0 %v588, 126
      %v593 = vpop.permute.xlu0 %592
      %594 = vrot.lane.b32.xlu0 %v589, 126
      %v595 = vpop.permute.xlu0 %594
      %v598 = vadd.f32 %v588, %v593
      %v599 = vadd.f32 %v589, %v595
      %601 = vset.pattern.permute.xlu0 0
      %602 = vperm.xlu0 %601, %v598
      %v603 = vpop.permute.xlu0 %602
      %606 = vset.pattern.permute.xlu0 0
      %607 = vperm.xlu0 %606, %v599
      %v608 = vpop.permute.xlu0 %607
      %v610 = vmul.f32 %v603, %v370
      %v611 = vmul.f32 %v608, %v371
      %612 = vset.pattern.permute.xlu0 1
      %613 = vperm.xlu0 %612, %v598
      %v614 = vpop.permute.xlu0 %613
      %616 = vset.pattern.permute.xlu0 1
      %617 = vperm.xlu0 %616, %v599
      %v618 = vpop.permute.xlu0 %617
      %v620 = vmul.f32 %v614, %v370
      %v621 = vmul.f32 %v618, %v371
      %624 = vrot.lane.b32.xlu0 %v620, 96
      %v625 = vpop.permute.xlu0 %624
      %626 = vrot.lane.b32.xlu0 %v621, 96
      %v627 = vpop.permute.xlu0 %626
      %v630 = vadd.f32 %v610, %v625
      %v631 = vadd.f32 %v611, %v627
      %v632 = vld [vmem:[%s6 + $0x3] sm:$0x1]
      %v633 = vld [vmem:[%s5] sm:$0xff]
      %v634 = vld [vmem:[%s5 + $0x8] sm:$0xff]
      %v635 = vld [vmem:[%s5 + $0x10] sm:$0xff]
      %v636 = vld [vmem:[%s5 + $0x18] sm:$0xff]
      %v637 = vperm.slane %v632, 0
      %v639 = vsel %vm352, %v630, 0
      %v642 = vsel %vm352, %v631, 0
      %644 = vmatpush.msra.mxu0 0.0
      %645 = vmatpush.msra.mxu0 0.0
      %646 = vmatpush.msra.mxu0 0.0
      %647 = vmatpush.msra.mxu0 0.0
      %648 = vmatpush.msra.mxu0 0.0
      %649 = vmatpush.msra.mxu0 0.0
      %650 = vmatpush.msra.mxu0 0.0
      %651 = vmatpush.msra.mxu0 0.0
      %652 = vmatpush.msra.mxu0 0.0
      %653 = vmatpush.msra.mxu0 0.0
      %654 = vmatpush.msra.mxu0 0.0
      %655 = vmatpush.msra.mxu0 0.0
      %656 = vmatpush.msra.mxu0 %v636
      %657 = vmatpush.msra.mxu0 %v635
      %658 = vmatpush.msra.mxu0 %v634
      %659 = vmatpush.msra.mxu0 %v633
      %660 = vmatmul.f32.gmra.mxu0 %v639
      %v661 = vpop.f32.mrf.mxu0
      %v662 = vadd.f32 %v637, %v661
      %663 = vmatmul.f32.gmra.mxu0 %v642
      %v664 = vpop.f32.mrf.mxu0
      %v665 = vadd.f32 %v637, %v664
      %666 = vdwg.mxu0
      %v667 = vtanh.pop %v662
      %v668 = vtanh.pop %v665
      %671 = vrot.lane.b32.xlu0 %v311, 64
      %v672 = vpop.permute.xlu0 %671
      %673 = vrot.lane.b32.xlu0 %v313, 64
      %v674 = vpop.permute.xlu0 %673
      %v677 = vadd.f32 %v667, %v672
      %v678 = vadd.f32 %v668, %v674
      %679 = vst.msk [vmem:[%s280] sm:$0xff] %vm556, %v677
      %680 = vst.msk [vmem:[%s280 + $0x8] sm:$0xff] %vm556, %v678
      %s681 = smul.u32 2, %s18
      %p682 = scmp.lt.s32.totalorder %s681, 3
      %s683 = scalar_select %p682, %s681, 3
      %s684 = smul.addr %s683, 8
      %s685 = scalar_lea.vmem %s7, %s684
      // Predicated region
      $region49: #{tpu_custom_call.1} parent=47 // pred_check
        %p686 = pneg %p188
      $region50: #{tpu_custom_call.1} parent=47 // pred_check_branch
        %688 = sbr.rel (%p686) target = $region52
      $region51: #{tpu_custom_call.1} parent=47 // pred_region
        %s689 = smul.u32 2, %s18
      $region52: #{tpu_custom_call.1} parent=47 // pred_fallthru
        _
    $region48: #{tpu_custom_call.1} parent=5 // pred_fallthru
      _
    %p690 = scmp.le.s32.totalorder 2, %s13
    // Predicated region
    $region53: #{tpu_custom_call.1} parent=5 // pred_check
      %p691 = pneg %p690
    $region54: #{tpu_custom_call.1} parent=5 // pred_check_branch
      %693 = sbr.rel (%p691) target = $region56
    $region55: #{tpu_custom_call.1} parent=5 // pred_region
      %s694 = ssub.s32 %s13, 2
      // Predicated region
      $region57: #{tpu_custom_call.1} parent=55 // pred_check
        %p695 = pneg %p194
      $region58: #{tpu_custom_call.1} parent=55 // pred_check_branch
        %697 = sbr.rel (%p695) target = $region60
      $region59: #{tpu_custom_call.1} parent=55 // pred_region
        %s698 = smul.u32 2, %s19
        %p699 = scmp.lt.s32.totalorder %s698, 3
        %s700 = scalar_select %p699, %s698, 3
        %s701 = smul.addr %s700, 8
        %s702 = scalar_lea.vmem %s7, %s701
      $region60: #{tpu_custom_call.1} parent=55 // pred_fallthru
        _
    $region56: #{tpu_custom_call.1} parent=5 // pred_fallthru
      _
  $region6: #{tpu_custom_call.1} parent=0 // loop_footer
    %s17 = sadd.s32 1, %s13
  $region7: #{tpu_custom_call.1} parent=0 // loop_footer_branch
    %12 = sbr.rel target = $region3
  $region8: #{tpu_custom_call.1} parent=0 // loop_exit
    _

</llo_original>
